<compile_context>
chip_gen: v7x
topology: tpu7x:2x2x1
jax: 0.10.0
libtpu: 0.0.40
codegen_flags: <defaults>
</compile_context>

<pallas_src>
import numpy as np

import jax
import jax.numpy as jnp
from jax.experimental import pallas as pl
from jax.experimental.pallas import tpu as pltpu  # noqa: F401  (kept for TPU backend)

BN_EPS = 1e-5
H = 64          # per-stream hidden width (fixed by the module)
LANES = 2 * H   # 128: both streams side by side


# ---------------------------------------------------------------------------
# Fused Pallas kernel: both streams (enc_i -> gen_i) in one step, block-diag.
# ---------------------------------------------------------------------------
def _fused_kernel(x1_ref, x2_ref, e1_ref, e2_ref, w_ref, b_ref, out_ref):
    f32, bf16 = jnp.float32, jnp.bfloat16
    B, S = x1_ref.shape
    L = e1_ref.shape[1]
    half = L // 2

    def bn_relu(h, gamma, beta):
        # BatchNorm1d, training mode: batch mean, biased variance, eps, affine.
        mean = jnp.mean(h, axis=0, keepdims=True)
        var = jnp.mean(jnp.square(h - mean), axis=0, keepdims=True)
        hn = (h - mean) * jax.lax.rsqrt(var + BN_EPS)
        return jnp.maximum(hn * gamma + beta, 0.0)

    # ----------------- Encoders (both streams, block-diagonal) -----------------
    x = jnp.concatenate([x1_ref[...], x2_ref[...]], axis=1)            # (B, 2S)
    h = jnp.dot(x.astype(bf16), w_ref[0][: 2 * S, :],
                preferred_element_type=f32) + b_ref[0]
    h = jnp.maximum(h, 0.0)
    # enc_2 bias intentionally dropped: exactly cancelled by training-mode BN.
    h = jnp.dot(h.astype(bf16), w_ref[1], preferred_element_type=f32)
    h = bn_relu(h, b_ref[1], b_ref[2])

    # merged heads: lanes [0,2L) = [mu1|mu2], lanes [2L,4L) = [log_var1|log_var2]
    heads = jnp.dot(h.astype(bf16), w_ref[2], preferred_element_type=f32) + b_ref[3]
    mu = heads[:, : 2 * L]
    log_var = heads[:, 2 * L: 4 * L]

    # reparameterization: z = mu + exp(0.5 * log_var) * eps
    eps = jnp.concatenate([e1_ref[...], e2_ref[...]], axis=1)          # (B, 2L)
    z = mu + jnp.exp(0.5 * log_var) * eps                              # (B, 2L) = [z1|z2]

    # ----------------- Generators (block-diagonal) -----------------
    # layer_1 weight is zero-padded over the pass-through half -> consumes z directly.
    g = jnp.dot(z.astype(bf16), w_ref[3][: 2 * L, :],
                preferred_element_type=f32) + b_ref[4]
    g = jnp.maximum(g, 0.0)
    # layer_2 bias intentionally dropped: exactly cancelled by training-mode BN.
    g = jnp.dot(g.astype(bf16), w_ref[4], preferred_element_type=f32)
    g = bn_relu(g, b_ref[5], b_ref[6])
    # layer_3 weight columns / bias are pre-placed at the transformed lane
    # positions; pass-through lanes carry zeros.
    g = (jnp.dot(g.astype(bf16), w_ref[5], preferred_element_type=f32)
         + b_ref[7])[:, : 2 * L]

    # combine pass-through (z) and transformed (g) lanes with a single select
    lane = jax.lax.broadcasted_iota(jnp.int32, (B, 2 * L), 1)
    t = jnp.where((lane % L) < half, z, g)                             # (B, 2L) = [t1|t2]

    # single merged store: [z1 | z2 | t1 | t2]
    out_ref[...] = jnp.concatenate([z, t], axis=1)


# ---------------------------------------------------------------------------
# Wrapper: one pallas_call, no grid (whole arrays live in VMEM).
# ---------------------------------------------------------------------------
@jax.jit
def cyclegan_gen_forward(params, state_1, state_2, eps_1, eps_2):
    B = state_1.shape[0]
    L = eps_1.shape[1]
    out = pl.pallas_call(
        _fused_kernel,
        out_shape=jax.ShapeDtypeStruct((B, 4 * L), jnp.float32),
    )(state_1, state_2, eps_1, eps_2, params["w_slab"], params["b_slab"])

    latent_vector_1 = out[:, 0:L]
    latent_vector_2 = out[:, L:2 * L]
    transfer_latent_vector_2 = out[:, 2 * L:3 * L]   # = gen_1(latent_vector_1)
    transfer_latent_vector_1 = out[:, 3 * L:4 * L]   # = gen_2(latent_vector_2)
    return (transfer_latent_vector_1, transfer_latent_vector_2,
            latent_vector_1, latent_vector_2)


# ---------------------------------------------------------------------------
# Parameter construction (PyTorch-style uniform init) + slab packing.
# ---------------------------------------------------------------------------
def _linear_init(key, fan_in, fan_out):
    kw, kb = jax.random.split(key)
    bound = 1.0 / float(fan_in) ** 0.5
    w = jax.random.uniform(kw, (fan_in, fan_out), jnp.float32, -bound, bound)
    b = jax.random.uniform(kb, (fan_out,), jnp.float32, -bound, bound)
    return w, b


def make_cyclegan_params(key, state_space, latent_space):
    S, L = state_space, latent_space
    assert L % 2 == 0, "latent_space must be even (generator split)"
    assert 2 * S <= 128 and 4 * L <= 128, "slab packing assumes 2*S <= 128 and 4*L <= 128"
    half = L // 2

    keys = iter(jax.random.split(key, 14))

    def enc():
        w1, b1 = _linear_init(next(keys), S, H)
        w2, _ = _linear_init(next(keys), H, H)     # pre-BN bias dropped (cancelled by BN)
        wmu, bmu = _linear_init(next(keys), H, L)
        wsig, bsig = _linear_init(next(keys), H, L)
        return dict(w1=w1, b1=b1, w2=w2, wmu=wmu, bmu=bmu, wsig=wsig, bsig=bsig,
                    gamma=jnp.ones((H,), jnp.float32), beta=jnp.zeros((H,), jnp.float32))

    def gen():
        w1, b1 = _linear_init(next(keys), half, H)
        w2, _ = _linear_init(next(keys), H, H)     # pre-BN bias dropped (cancelled by BN)
        w3, b3 = _linear_init(next(keys), H, half)
        return dict(w1=w1, b1=b1, w2=w2, w3=w3, b3=b3,
                    gamma=jnp.ones((H,), jnp.float32), beta=jnp.zeros((H,), jnp.float32))

    e1, e2 = enc(), enc()
    g1, g2 = gen(), gen()

    # --- bf16 weight slab (6, 128, 128): block-diagonal per layer -----------
    w = jnp.zeros((6, LANES, LANES), jnp.float32)
    # slot 0: encoder layer 1, (2S, 128)
    w = w.at[0, 0:S, 0:H].set(e1["w1"]).at[0, S:2 * S, H:2 * H].set(e2["w1"])
    # slot 1: encoder layer 2, (128, 128)
    w = w.at[1, 0:H, 0:H].set(e1["w2"]).at[1, H:2 * H, H:2 * H].set(e2["w2"])
    # slot 2: merged heads (128, 4L) = [mu1 | mu2 | sig1 | sig2]
    w = w.at[2, 0:H, 0:L].set(e1["wmu"]).at[2, H:2 * H, L:2 * L].set(e2["wmu"])
    w = w.at[2, 0:H, 2 * L:3 * L].set(e1["wsig"]).at[2, H:2 * H, 3 * L:4 * L].set(e2["wsig"])
    # slot 3: generator layer 1, zero-padded over the pass-through half, (2L, 128)
    w = w.at[3, half:L, 0:H].set(g1["w1"]).at[3, L + half:2 * L, H:2 * H].set(g2["w1"])
    # slot 4: generator layer 2, (128, 128)
    w = w.at[4, 0:H, 0:H].set(g1["w2"]).at[4, H:2 * H, H:2 * H].set(g2["w2"])
    # slot 5: generator layer 3, columns placed at the transformed lane positions
    w = w.at[5, 0:H, half:L].set(g1["w3"]).at[5, H:2 * H, L + half:2 * L].set(g2["w3"])
    w_slab = w.astype(jnp.bfloat16)

    # --- f32 bias / affine slab (8, 128) ------------------------------------
    b = jnp.zeros((8, LANES), jnp.float32)
    b = b.at[0, 0:H].set(e1["b1"]).at[0, H:2 * H].set(e2["b1"])
    b = b.at[1, 0:H].set(e1["gamma"]).at[1, H:2 * H].set(e2["gamma"])
    b = b.at[2, 0:H].set(e1["beta"]).at[2, H:2 * H].set(e2["beta"])
    b = b.at[3, 0:L].set(e1["bmu"]).at[3, L:2 * L].set(e2["bmu"])
    b = b.at[3, 2 * L:3 * L].set(e1["bsig"]).at[3, 3 * L:4 * L].set(e2["bsig"])
    b = b.at[4, 0:H].set(g1["b1"]).at[4, H:2 * H].set(g2["b1"])
    b = b.at[5, 0:H].set(g1["gamma"]).at[5, H:2 * H].set(g2["gamma"])
    b = b.at[6, 0:H].set(g1["beta"]).at[6, H:2 * H].set(g2["beta"])
    b = b.at[7, half:L].set(g1["b3"]).at[7, L + half:2 * L].set(g2["b3"])
    b_slab = b

    packed = {"w_slab": w_slab, "b_slab": b_slab}
    raw = {"enc_1": e1, "enc_2": e2, "gen_1": g1, "gen_2": g2}
    return packed, raw


# ---------------------------------------------------------------------------
# Pure-JAX reference (mirrors the PyTorch module; pre-BN biases omitted, which
# is mathematically exact under training-mode BatchNorm).
# ---------------------------------------------------------------------------
def _reference_forward(raw, state_1, state_2, eps_1, eps_2):
    def bn_relu(h, gamma, beta):
        mean = jnp.mean(h, axis=0, keepdims=True)
        var = jnp.mean((h - mean) ** 2, axis=0, keepdims=True)
        return jax.nn.relu((h - mean) / jnp.sqrt(var + BN_EPS) * gamma + beta)

    def encoder(p, x, eps):
        h = jax.nn.relu(x @ p["w1"] + p["b1"])
        h = bn_relu(h @ p["w2"], p["gamma"], p["beta"])
        mu = h @ p["wmu"] + p["bmu"]
        log_var = h @ p["wsig"] + p["bsig"]
        return mu + jnp.exp(0.5 * log_var) * eps

    def generator(p, z):
        half = z.shape[1] // 2
        s1, s2 = z[:, :half], z[:, half:]
        h = jax.nn.relu(s2 @ p["w1"] + p["b1"])
        h = bn_relu(h @ p["w2"], p["gamma"], p["beta"])
        return jnp.concatenate([s1, h @ p["w3"] + p["b3"]], axis=1)

    z1 = encoder(raw["enc_1"], state_1, eps_1)
    z2 = encoder(raw["enc_2"], state_2, eps_2)
    t2 = generator(raw["gen_1"], z1)   # transfer_latent_vector_2
    t1 = generator(raw["gen_2"], z2)   # transfer_latent_vector_1
    return t1, t2, z1, z2


# ---------------------------------------------------------------------------
# Example run
# ---------------------------------------------------------------------------
if __name__ == "__main__":
    BATCH = 8
    STATE_SPACE = 16
    LATENT_SPACE = 8

    root = jax.random.PRNGKey(0)
    k_params, k_x1, k_x2, k_e1, k_e2 = jax.random.split(root, 5)

    packed, raw = make_cyclegan_params(k_params, STATE_SPACE, LATENT_SPACE)

    state_1 = jax.random.normal(k_x1, (BATCH, STATE_SPACE), jnp.float32)
    state_2 = jax.random.normal(k_x2, (BATCH, STATE_SPACE), jnp.float32)
    # reparameterization noise (torch.randn equivalent), generated deterministically
    eps_1 = jax.random.normal(k_e1, (BATCH, LATENT_SPACE), jnp.float32)
    eps_2 = jax.random.normal(k_e2, (BATCH, LATENT_SPACE), jnp.float32)

    t1, t2, z1, z2 = cyclegan_gen_forward(packed, state_1, state_2, eps_1, eps_2)
    jax.block_until_ready((t1, t2, z1, z2))

    assert t1.shape == (BATCH, LATENT_SPACE)
    assert t2.shape == (BATCH, LATENT_SPACE)
    assert z1.shape == (BATCH, LATENT_SPACE)
    assert z2.shape == (BATCH, LATENT_SPACE)

    # loose-tolerance check vs. an f32 pure-JAX reference (kernel uses bf16 weights)
    rt1, rt2, rz1, rz2 = _reference_forward(raw, state_1, state_2, eps_1, eps_2)
    np.testing.assert_allclose(np.asarray(z1), np.asarray(rz1), rtol=1e-1, atol=1e-1)
    np.testing.assert_allclose(np.asarray(z2), np.asarray(rz2), rtol=1e-1, atol=1e-1)
    np.testing.assert_allclose(np.asarray(t1), np.asarray(rt1), rtol=1e-1, atol=1e-1)
    np.testing.assert_allclose(np.asarray(t2), np.asarray(rt2), rtol=1e-1, atol=1e-1)

    print("KERNEL_OK")
</pallas_src>

<mosaic_0001>
module attributes {stable_mosaic.version = 11 : i64} {
  func.func @_fused_kernel(%arg0: memref<8x16xf32, #tpu.memory_space<vmem>>, %arg1: memref<8x16xf32, #tpu.memory_space<vmem>>, %arg2: memref<8x8xf32, #tpu.memory_space<vmem>>, %arg3: memref<8x8xf32, #tpu.memory_space<vmem>>, %arg4: memref<6x128x128xbf16, #tpu.memory_space<vmem>>, %arg5: memref<8x128xf32, #tpu.memory_space<vmem>>, %arg6: memref<8x32xf32, #tpu.memory_space<vmem>>) attributes {dimension_semantics = [], scalar_prefetch = 0 : i64, scratch_operands = 0 : i64, tpu.core_type = #tpu.core_type<tc>} {
    %c0 = arith.constant 0 : index
    %c0_0 = arith.constant 0 : index
    %0 = vector.load %arg0[%c0, %c0_0] : memref<8x16xf32, #tpu.memory_space<vmem>>, vector<8x16xf32>
    %c0_1 = arith.constant 0 : index
    %c0_2 = arith.constant 0 : index
    %1 = vector.load %arg1[%c0_1, %c0_2] : memref<8x16xf32, #tpu.memory_space<vmem>>, vector<8x16xf32>
    %2 = tpu.concatenate %0, %1 in 1 : vector<8x16xf32>, vector<8x16xf32> -> vector<8x32xf32>
    %3 = arith.truncf %2 : vector<8x32xf32> to vector<8x32xbf16>
    %c0_3 = arith.constant 0 : index
    %c0_4 = arith.constant 0 : index
    %c0_5 = arith.constant 0 : index
    %4 = vector.load %arg4[%c0_3, %c0_4, %c0_5] : memref<6x128x128xbf16, #tpu.memory_space<vmem>>, vector<1x128x128xbf16>
    %5 = vector.shape_cast %4 : vector<1x128x128xbf16> to vector<128x128xbf16>
    %6 = vector.extract_strided_slice %5 {offsets = [0, 0], sizes = [32, 128], strides = [1, 1]} : vector<128x128xbf16> to vector<32x128xbf16>
    %cst = arith.constant dense<0.000000e+00> : vector<8x128xf32>
    %7 = tpu.matmul %3, %6, %cst {dimension_numbers = #tpu.dot_dimension_numbers<[1], [0], [0], [1], [0, 0, 1, 1], [], []>} : vector<8x32xbf16>, vector<32x128xbf16>, vector<8x128xf32> -> vector<8x128xf32>
    %c0_6 = arith.constant 0 : index
    %c0_7 = arith.constant 0 : index
    %8 = vector.load %arg5[%c0_6, %c0_7] : memref<8x128xf32, #tpu.memory_space<vmem>>, vector<1x128xf32>
    %9 = vector.shape_cast %8 : vector<1x128xf32> to vector<128xf32>
    %10 = vector.shape_cast %9 : vector<128xf32> to vector<1x128xf32>
    %11 = vector.broadcast %10 : vector<1x128xf32> to vector<8x128xf32>
    %12 = arith.addf %7, %11 : vector<8x128xf32>
    %cst_8 = arith.constant 0.000000e+00 : f32
    %13 = vector.broadcast %cst_8 : f32 to vector<8x128xf32>
    %14 = arith.maximumf %12, %13 : vector<8x128xf32>
    %15 = arith.truncf %14 : vector<8x128xf32> to vector<8x128xbf16>
    %c1 = arith.constant 1 : index
    %c0_9 = arith.constant 0 : index
    %c0_10 = arith.constant 0 : index
    %16 = vector.load %arg4[%c1, %c0_9, %c0_10] : memref<6x128x128xbf16, #tpu.memory_space<vmem>>, vector<1x128x128xbf16>
    %17 = vector.shape_cast %16 : vector<1x128x128xbf16> to vector<128x128xbf16>
    %cst_11 = arith.constant dense<0.000000e+00> : vector<8x128xf32>
    %18 = tpu.matmul %15, %17, %cst_11 {dimension_numbers = #tpu.dot_dimension_numbers<[1], [0], [0], [1], [0, 0, 1, 1], [], []>} : vector<8x128xbf16>, vector<128x128xbf16>, vector<8x128xf32> -> vector<8x128xf32>
    %c1_12 = arith.constant 1 : index
    %c0_13 = arith.constant 0 : index
    %19 = vector.load %arg5[%c1_12, %c0_13] : memref<8x128xf32, #tpu.memory_space<vmem>>, vector<1x128xf32>
    %20 = vector.shape_cast %19 : vector<1x128xf32> to vector<128xf32>
    %c2 = arith.constant 2 : index
    %c0_14 = arith.constant 0 : index
    %21 = vector.load %arg5[%c2, %c0_14] : memref<8x128xf32, #tpu.memory_space<vmem>>, vector<1x128xf32>
    %22 = vector.shape_cast %21 : vector<1x128xf32> to vector<128xf32>
    %cst_15 = arith.constant dense<0.000000e+00> : vector<128xf32>
    %23 = vector.multi_reduction <add>, %18, %cst_15 [0] : vector<8x128xf32> to vector<128xf32>
    %24 = vector.shape_cast %23 : vector<128xf32> to vector<1x128xf32>
    %cst_16 = arith.constant 8.000000e+00 : f32
    %25 = vector.broadcast %cst_16 : f32 to vector<1x128xf32>
    %26 = arith.divf %24, %25 : vector<1x128xf32>
    %27 = vector.broadcast %26 : vector<1x128xf32> to vector<8x128xf32>
    %28 = arith.subf %18, %27 : vector<8x128xf32>
    %29 = arith.mulf %28, %28 : vector<8x128xf32>
    %cst_17 = arith.constant dense<0.000000e+00> : vector<128xf32>
    %30 = vector.multi_reduction <add>, %29, %cst_17 [0] : vector<8x128xf32> to vector<128xf32>
    %31 = vector.shape_cast %30 : vector<128xf32> to vector<1x128xf32>
    %cst_18 = arith.constant 8.000000e+00 : f32
    %32 = vector.broadcast %cst_18 : f32 to vector<1x128xf32>
    %33 = arith.divf %31, %32 : vector<1x128xf32>
    %34 = vector.broadcast %26 : vector<1x128xf32> to vector<8x128xf32>
    %35 = arith.subf %18, %34 : vector<8x128xf32>
    %cst_19 = arith.constant 9.99999974E-6 : f32
    %36 = vector.broadcast %cst_19 : f32 to vector<1x128xf32>
    %37 = arith.addf %33, %36 : vector<1x128xf32>
    %38 = math.rsqrt %37 : vector<1x128xf32>
    %39 = vector.broadcast %38 : vector<1x128xf32> to vector<8x128xf32>
    %40 = arith.mulf %35, %39 : vector<8x128xf32>
    %41 = vector.shape_cast %20 : vector<128xf32> to vector<1x128xf32>
    %42 = vector.broadcast %41 : vector<1x128xf32> to vector<8x128xf32>
    %43 = arith.mulf %40, %42 : vector<8x128xf32>
    %44 = vector.shape_cast %22 : vector<128xf32> to vector<1x128xf32>
    %45 = vector.broadcast %44 : vector<1x128xf32> to vector<8x128xf32>
    %46 = arith.addf %43, %45 : vector<8x128xf32>
    %cst_20 = arith.constant 0.000000e+00 : f32
    %47 = vector.broadcast %cst_20 : f32 to vector<8x128xf32>
    %48 = arith.maximumf %46, %47 : vector<8x128xf32>
    %49 = arith.truncf %48 : vector<8x128xf32> to vector<8x128xbf16>
    %c2_21 = arith.constant 2 : index
    %c0_22 = arith.constant 0 : index
    %c0_23 = arith.constant 0 : index
    %50 = vector.load %arg4[%c2_21, %c0_22, %c0_23] : memref<6x128x128xbf16, #tpu.memory_space<vmem>>, vector<1x128x128xbf16>
    %51 = vector.shape_cast %50 : vector<1x128x128xbf16> to vector<128x128xbf16>
    %cst_24 = arith.constant dense<0.000000e+00> : vector<8x128xf32>
    %52 = tpu.matmul %49, %51, %cst_24 {dimension_numbers = #tpu.dot_dimension_numbers<[1], [0], [0], [1], [0, 0, 1, 1], [], []>} : vector<8x128xbf16>, vector<128x128xbf16>, vector<8x128xf32> -> vector<8x128xf32>
    %c3 = arith.constant 3 : index
    %c0_25 = arith.constant 0 : index
    %53 = vector.load %arg5[%c3, %c0_25] : memref<8x128xf32, #tpu.memory_space<vmem>>, vector<1x128xf32>
    %54 = vector.shape_cast %53 : vector<1x128xf32> to vector<128xf32>
    %55 = vector.shape_cast %54 : vector<128xf32> to vector<1x128xf32>
    %56 = vector.broadcast %55 : vector<1x128xf32> to vector<8x128xf32>
    %57 = arith.addf %52, %56 : vector<8x128xf32>
    %58 = vector.extract_strided_slice %57 {offsets = [0, 0], sizes = [8, 16], strides = [1, 1]} : vector<8x128xf32> to vector<8x16xf32>
    %59 = vector.extract_strided_slice %57 {offsets = [0, 16], sizes = [8, 16], strides = [1, 1]} : vector<8x128xf32> to vector<8x16xf32>
    %c0_26 = arith.constant 0 : index
    %c0_27 = arith.constant 0 : index
    %60 = vector.load %arg2[%c0_26, %c0_27] : memref<8x8xf32, #tpu.memory_space<vmem>>, vector<8x8xf32>
    %c0_28 = arith.constant 0 : index
    %c0_29 = arith.constant 0 : index
    %61 = vector.load %arg3[%c0_28, %c0_29] : memref<8x8xf32, #tpu.memory_space<vmem>>, vector<8x8xf32>
    %62 = tpu.concatenate %60, %61 in 1 : vector<8x8xf32>, vector<8x8xf32> -> vector<8x16xf32>
    %cst_30 = arith.constant 5.000000e-01 : f32
    %63 = vector.broadcast %cst_30 : f32 to vector<8x16xf32>
    %64 = arith.mulf %63, %59 : vector<8x16xf32>
    %65 = math.exp %64 : vector<8x16xf32>
    %66 = arith.mulf %65, %62 : vector<8x16xf32>
    %67 = arith.addf %58, %66 : vector<8x16xf32>
    %68 = arith.truncf %67 : vector<8x16xf32> to vector<8x16xbf16>
    %c3_31 = arith.constant 3 : index
    %c0_32 = arith.constant 0 : index
    %c0_33 = arith.constant 0 : index
    %69 = vector.load %arg4[%c3_31, %c0_32, %c0_33] : memref<6x128x128xbf16, #tpu.memory_space<vmem>>, vector<1x128x128xbf16>
    %70 = vector.shape_cast %69 : vector<1x128x128xbf16> to vector<128x128xbf16>
    %71 = vector.extract_strided_slice %70 {offsets = [0, 0], sizes = [16, 128], strides = [1, 1]} : vector<128x128xbf16> to vector<16x128xbf16>
    %cst_34 = arith.constant dense<0.000000e+00> : vector<8x128xf32>
    %72 = tpu.matmul %68, %71, %cst_34 {dimension_numbers = #tpu.dot_dimension_numbers<[1], [0], [0], [1], [0, 0, 1, 1], [], []>} : vector<8x16xbf16>, vector<16x128xbf16>, vector<8x128xf32> -> vector<8x128xf32>
    %c4 = arith.constant 4 : index
    %c0_35 = arith.constant 0 : index
    %73 = vector.load %arg5[%c4, %c0_35] : memref<8x128xf32, #tpu.memory_space<vmem>>, vector<1x128xf32>
    %74 = vector.shape_cast %73 : vector<1x128xf32> to vector<128xf32>
    %75 = vector.shape_cast %74 : vector<128xf32> to vector<1x128xf32>
    %76 = vector.broadcast %75 : vector<1x128xf32> to vector<8x128xf32>
    %77 = arith.addf %72, %76 : vector<8x128xf32>
    %cst_36 = arith.constant 0.000000e+00 : f32
    %78 = vector.broadcast %cst_36 : f32 to vector<8x128xf32>
    %79 = arith.maximumf %77, %78 : vector<8x128xf32>
    %80 = arith.truncf %79 : vector<8x128xf32> to vector<8x128xbf16>
    %c4_37 = arith.constant 4 : index
    %c0_38 = arith.constant 0 : index
    %c0_39 = arith.constant 0 : index
    %81 = vector.load %arg4[%c4_37, %c0_38, %c0_39] : memref<6x128x128xbf16, #tpu.memory_space<vmem>>, vector<1x128x128xbf16>
    %82 = vector.shape_cast %81 : vector<1x128x128xbf16> to vector<128x128xbf16>
    %cst_40 = arith.constant dense<0.000000e+00> : vector<8x128xf32>
    %83 = tpu.matmul %80, %82, %cst_40 {dimension_numbers = #tpu.dot_dimension_numbers<[1], [0], [0], [1], [0, 0, 1, 1], [], []>} : vector<8x128xbf16>, vector<128x128xbf16>, vector<8x128xf32> -> vector<8x128xf32>
    %c5 = arith.constant 5 : index
    %c0_41 = arith.constant 0 : index
    %84 = vector.load %arg5[%c5, %c0_41] : memref<8x128xf32, #tpu.memory_space<vmem>>, vector<1x128xf32>
    %85 = vector.shape_cast %84 : vector<1x128xf32> to vector<128xf32>
    %c6 = arith.constant 6 : index
    %c0_42 = arith.constant 0 : index
    %86 = vector.load %arg5[%c6, %c0_42] : memref<8x128xf32, #tpu.memory_space<vmem>>, vector<1x128xf32>
    %87 = vector.shape_cast %86 : vector<1x128xf32> to vector<128xf32>
    %cst_43 = arith.constant dense<0.000000e+00> : vector<128xf32>
    %88 = vector.multi_reduction <add>, %83, %cst_43 [0] : vector<8x128xf32> to vector<128xf32>
    %89 = vector.shape_cast %88 : vector<128xf32> to vector<1x128xf32>
    %cst_44 = arith.constant 8.000000e+00 : f32
    %90 = vector.broadcast %cst_44 : f32 to vector<1x128xf32>
    %91 = arith.divf %89, %90 : vector<1x128xf32>
    %92 = vector.broadcast %91 : vector<1x128xf32> to vector<8x128xf32>
    %93 = arith.subf %83, %92 : vector<8x128xf32>
    %94 = arith.mulf %93, %93 : vector<8x128xf32>
    %cst_45 = arith.constant dense<0.000000e+00> : vector<128xf32>
    %95 = vector.multi_reduction <add>, %94, %cst_45 [0] : vector<8x128xf32> to vector<128xf32>
    %96 = vector.shape_cast %95 : vector<128xf32> to vector<1x128xf32>
    %cst_46 = arith.constant 8.000000e+00 : f32
    %97 = vector.broadcast %cst_46 : f32 to vector<1x128xf32>
    %98 = arith.divf %96, %97 : vector<1x128xf32>
    %99 = vector.broadcast %91 : vector<1x128xf32> to vector<8x128xf32>
    %100 = arith.subf %83, %99 : vector<8x128xf32>
    %cst_47 = arith.constant 9.99999974E-6 : f32
    %101 = vector.broadcast %cst_47 : f32 to vector<1x128xf32>
    %102 = arith.addf %98, %101 : vector<1x128xf32>
    %103 = math.rsqrt %102 : vector<1x128xf32>
    %104 = vector.broadcast %103 : vector<1x128xf32> to vector<8x128xf32>
    %105 = arith.mulf %100, %104 : vector<8x128xf32>
    %106 = vector.shape_cast %85 : vector<128xf32> to vector<1x128xf32>
    %107 = vector.broadcast %106 : vector<1x128xf32> to vector<8x128xf32>
    %108 = arith.mulf %105, %107 : vector<8x128xf32>
    %109 = vector.shape_cast %87 : vector<128xf32> to vector<1x128xf32>
    %110 = vector.broadcast %109 : vector<1x128xf32> to vector<8x128xf32>
    %111 = arith.addf %108, %110 : vector<8x128xf32>
    %cst_48 = arith.constant 0.000000e+00 : f32
    %112 = vector.broadcast %cst_48 : f32 to vector<8x128xf32>
    %113 = arith.maximumf %111, %112 : vector<8x128xf32>
    %114 = arith.truncf %113 : vector<8x128xf32> to vector<8x128xbf16>
    %c5_49 = arith.constant 5 : index
    %c0_50 = arith.constant 0 : index
    %c0_51 = arith.constant 0 : index
    %115 = vector.load %arg4[%c5_49, %c0_50, %c0_51] : memref<6x128x128xbf16, #tpu.memory_space<vmem>>, vector<1x128x128xbf16>
    %116 = vector.shape_cast %115 : vector<1x128x128xbf16> to vector<128x128xbf16>
    %cst_52 = arith.constant dense<0.000000e+00> : vector<8x128xf32>
    %117 = tpu.matmul %114, %116, %cst_52 {dimension_numbers = #tpu.dot_dimension_numbers<[1], [0], [0], [1], [0, 0, 1, 1], [], []>} : vector<8x128xbf16>, vector<128x128xbf16>, vector<8x128xf32> -> vector<8x128xf32>
    %c7 = arith.constant 7 : index
    %c0_53 = arith.constant 0 : index
    %118 = vector.load %arg5[%c7, %c0_53] : memref<8x128xf32, #tpu.memory_space<vmem>>, vector<1x128xf32>
    %119 = vector.shape_cast %118 : vector<1x128xf32> to vector<128xf32>
    %120 = vector.shape_cast %119 : vector<128xf32> to vector<1x128xf32>
    %121 = vector.broadcast %120 : vector<1x128xf32> to vector<8x128xf32>
    %122 = arith.addf %117, %121 : vector<8x128xf32>
    %123 = vector.extract_strided_slice %122 {offsets = [0, 0], sizes = [8, 16], strides = [1, 1]} : vector<8x128xf32> to vector<8x16xf32>
    %124 = tpu.iota {dimensions = array<i32: 1>} : vector<8x16xi32>
    %c8_i32 = arith.constant 8 : i32
    %c0_i32 = arith.constant 0 : i32
    %125 = arith.cmpi eq, %c8_i32, %c0_i32 : i32
    %c1_i32 = arith.constant 1 : i32
    %126 = arith.select %125, %c1_i32, %c8_i32 : i32
    %127 = vector.broadcast %126 : i32 to vector<8x16xi32>
    %128 = arith.remsi %124, %127 : vector<8x16xi32>
    %c0_i32_54 = arith.constant 0 : i32
    %129 = vector.broadcast %c0_i32_54 : i32 to vector<8x16xi32>
    %130 = arith.cmpi ne, %128, %129 : vector<8x16xi32>
    %c0_i32_55 = arith.constant 0 : i32
    %131 = vector.broadcast %c0_i32_55 : i32 to vector<8x16xi32>
    %132 = arith.cmpi slt, %128, %131 : vector<8x16xi32>
    %c0_i32_56 = arith.constant 0 : i32
    %133 = arith.cmpi slt, %126, %c0_i32_56 : i32
    %134 = vector.broadcast %133 : i1 to vector<8x16xi1>
    %135 = vector.broadcast %134 : vector<8x16xi1> to vector<8x16xi1>
    %136 = arith.xori %132, %135 : vector<8x16xi1>
    %137 = arith.andi %136, %130 : vector<8x16xi1>
    %138 = vector.broadcast %126 : i32 to vector<8x16xi32>
    %139 = arith.addi %128, %138 : vector<8x16xi32>
    %140 = arith.select %137, %139, %128 : vector<8x16xi1>, vector<8x16xi32>
    %c4_i32 = arith.constant 4 : i32
    %141 = vector.broadcast %c4_i32 : i32 to vector<8x16xi32>
    %142 = arith.cmpi slt, %140, %141 : vector<8x16xi32>
    %143 = arith.select %142, %67, %123 : vector<8x16xi1>, vector<8x16xf32>
    %144 = tpu.concatenate %67, %143 in 1 : vector<8x16xf32>, vector<8x16xf32> -> vector<8x32xf32>
    %c0_57 = arith.constant 0 : index
    %c0_58 = arith.constant 0 : index
    %145 = vector.load %arg6[%c0_57, %c0_58] : memref<8x32xf32, #tpu.memory_space<vmem>>, vector<8x32xf32>
    tpu.vector_store %arg6[%c0_57, %c0_58], %144 {strides = array<i32>} : memref<8x32xf32, #tpu.memory_space<vmem>>, vector<8x32xf32>,
    return
  }
}

</mosaic_0001>

<llo_original>
// kernel: cyclegan_gen_forward.1
$region0: #{cyclegan_gen_forward.1}
  #allocation0 [shape = 'u32[]', space=smem, size = 0x4, offset = 0x4, fixed_abs, tag = 'smem constant byte address 0x4 - core index']
  #allocation1 [shape = 'u32[144,128]{1,0:T(1,128)}', space=vmem, size = 0x12000, scoped, tag = 'internal scratch']
  %s0 = inlined_call_operand.hbm [shape: f32[8,16], index: 0, kind: input, shape index: {}]
  %s1 = inlined_call_operand.vmem [shape: f32[8,16], index: 1, kind: input, shape index: {}]
  %s2 = inlined_call_operand.hbm [shape: f32[8,8], index: 2, kind: input, shape index: {}]
  %s3 = inlined_call_operand.vmem [shape: f32[8,8], index: 3, kind: input, shape index: {}]
  %s4 = inlined_call_operand.hbm [shape: bf16[6,128,128], index: 4, kind: input, shape index: {}]
  %s5 = inlined_call_operand.hbm [shape: f32[8,128], index: 5, kind: input, shape index: {}]
  %s6 = inlined_call_operand.vmem [shape: f32[8,32], index: 6, kind: output, shape index: {}]
  %s7 = sld [smem:[#allocation0]]
  $region50: #{cyclegan_gen_forward.1} parent=0
    _
  %s9 = ssub.s32 1, %s7
  %s10 = scalar_select 0, %s9, %s7
  $region1: #{cyclegan_gen_forward.1} parent=0
    #allocation2 [shape = 'u8[4096]{0}', space=vmem, size = 0x1000, scoped, tag = 'input window, operand 0, single buffered']
    #allocation3 [shape = 's32[1]{0}', space=sflag, size = 0x4, scoped, tag = 'scoped memory for cyclegan_gen_forward.1']
    #allocation4 [shape = 'u8[4096]{0}', space=vmem, size = 0x1000, scoped, tag = 'input window, operand 2, single buffered']
    #allocation5 [shape = 's32[1]{0}', space=sflag, size = 0x4, scoped, tag = 'scoped memory for cyclegan_gen_forward.1']
    #allocation6 [shape = 'u8[196608]{0}', space=vmem, size = 0x30000, scoped, tag = 'input window, operand 4, single buffered']
    #allocation7 [shape = 'u8[4096]{0}', space=vmem, size = 0x1000, scoped, tag = 'input window, operand 5, single buffered']
    #allocation8 [shape = 's32[1]{0}', space=sflag, size = 0x4, scoped, tag = 'scoped memory for cyclegan_gen_forward.1']
    %11 = vsyncpa [#allocation3], 0
    %12 = vsyncpa [#allocation5], 0
    %13 = vsyncpa [#allocation8], 0
    // Predicated region
    $region2: #{cyclegan_gen_forward.1} parent=1 // pred_check
      _
    $region3: #{cyclegan_gen_forward.1} parent=1 // pred_check_branch
      %15 = sbr.rel (0) target = $region5
    $region4: #{cyclegan_gen_forward.1} parent=1 // pred_region
      %s17 = ssub.s32 128, 128
      %18 = vsyncadd [#allocation3], %s17
      %s20 = sshll.u32 [#allocation2], 4
      %s21 = int_to_ptr.vmem [resolvable:$true] %s20
      %23 = dma.hbm_to_vmem [thread:$0]  %s0, 128, %s21, [#allocation3]
    $region5: #{cyclegan_gen_forward.1} parent=1 // pred_fallthru
      _
    // Predicated region
    $region6: #{cyclegan_gen_forward.1} parent=1 // pred_check
      _
    $region7: #{cyclegan_gen_forward.1} parent=1 // pred_check_branch
      %25 = sbr.rel (0) target = $region9
    $region8: #{cyclegan_gen_forward.1} parent=1 // pred_region
      _
    $region9: #{cyclegan_gen_forward.1} parent=1 // pred_fallthru
      _
    // Predicated region
    $region10: #{cyclegan_gen_forward.1} parent=1 // pred_check
      _
    $region11: #{cyclegan_gen_forward.1} parent=1 // pred_check_branch
      %27 = sbr.rel (0) target = $region13
    $region12: #{cyclegan_gen_forward.1} parent=1 // pred_region
      %s29 = ssub.s32 128, 128
      %30 = vsyncadd [#allocation5], %s29
      %s32 = sshll.u32 [#allocation4], 4
      %s33 = int_to_ptr.vmem [resolvable:$true] %s32
      %35 = dma.hbm_to_vmem [thread:$0]  %s2, 128, %s33, [#allocation5]
    $region13: #{cyclegan_gen_forward.1} parent=1 // pred_fallthru
      _
    // Predicated region
    $region14: #{cyclegan_gen_forward.1} parent=1 // pred_check
      _
    $region15: #{cyclegan_gen_forward.1} parent=1 // pred_check_branch
      %37 = sbr.rel (0) target = $region17
    $region16: #{cyclegan_gen_forward.1} parent=1 // pred_region
      _
    $region17: #{cyclegan_gen_forward.1} parent=1 // pred_fallthru
      _
    // Predicated region
    $region18: #{cyclegan_gen_forward.1} parent=1 // pred_check
      _
    $region19: #{cyclegan_gen_forward.1} parent=1 // pred_check_branch
      %39 = sbr.rel (0) target = $region21
    $region20: #{cyclegan_gen_forward.1} parent=1 // pred_region
      %s41 = ssub.s32 6144, 6144
      %42 = vsyncadd [#allocation5], %s41
      %s43 = sshll.u32 [#allocation6], 4
      %s44 = int_to_ptr.vmem [resolvable:$true] %s43
      %49 = dma.hbm_to_vmem [thread:$0]  %s4, 6144, %s44, [#allocation5], 64, 64, 4
    $region21: #{cyclegan_gen_forward.1} parent=1 // pred_fallthru
      _
    // Predicated region
    $region22: #{cyclegan_gen_forward.1} parent=1 // pred_check
      _
    $region23: #{cyclegan_gen_forward.1} parent=1 // pred_check_branch
      %51 = sbr.rel (0) target = $region25
    $region24: #{cyclegan_gen_forward.1} parent=1 // pred_region
      %s53 = ssub.s32 128, 128
      %54 = vsyncadd [#allocation8], %s53
      %s56 = sshll.u32 [#allocation7], 4
      %s57 = int_to_ptr.vmem [resolvable:$true] %s56
      %59 = dma.hbm_to_vmem [thread:$0]  %s5, 128, %s57, [#allocation8]
    $region25: #{cyclegan_gen_forward.1} parent=1 // pred_fallthru
      _
    // Predicated region
    $region26: #{cyclegan_gen_forward.1} parent=1 // pred_check
      _
    $region27: #{cyclegan_gen_forward.1} parent=1 // pred_check_branch
      %61 = sbr.rel (0) target = $region29
    $region28: #{cyclegan_gen_forward.1} parent=1 // pred_region
      %62 = dma.done [#allocation3], 128
    $region29: #{cyclegan_gen_forward.1} parent=1 // pred_fallthru
      _
    // Predicated region
    $region30: #{cyclegan_gen_forward.1} parent=1 // pred_check
      _
    $region31: #{cyclegan_gen_forward.1} parent=1 // pred_check_branch
      %64 = sbr.rel (0) target = $region33
    $region32: #{cyclegan_gen_forward.1} parent=1 // pred_region
      %65 = dma.done [#allocation5], 128
    $region33: #{cyclegan_gen_forward.1} parent=1 // pred_fallthru
      _
    // Predicated region
    $region34: #{cyclegan_gen_forward.1} parent=1 // pred_check
      _
    $region35: #{cyclegan_gen_forward.1} parent=1 // pred_check_branch
      %67 = sbr.rel (0) target = $region37
    $region36: #{cyclegan_gen_forward.1} parent=1 // pred_region
      %68 = dma.done [#allocation5], 6144
    $region37: #{cyclegan_gen_forward.1} parent=1 // pred_fallthru
      _
    // Predicated region
    $region38: #{cyclegan_gen_forward.1} parent=1 // pred_check
      _
    $region39: #{cyclegan_gen_forward.1} parent=1 // pred_check_branch
      %70 = sbr.rel (0) target = $region41
    $region40: #{cyclegan_gen_forward.1} parent=1 // pred_region
      %71 = dma.done [#allocation8], 128
    $region41: #{cyclegan_gen_forward.1} parent=1 // pred_fallthru
      _
    %v73 = vld [vmem:[#allocation2] sm:$0xff]
    %v74 = vld [vmem:[%s1] sm:$0xff]
    %76 = vrot.lane.b32.xlu0 %v74, 16
    %v77 = vpop.permute.xlu0 %76
    %vm79 = vcmask 130048
    %v80 = vsel %vm79, %v73, %v77
    %v81 = vpack.c.bf16 %v80, %v80
    %v82 = vld [vmem:[#allocation6] sm:$0xf]
    %v83 = vld [vmem:[#allocation6 + $0x4] sm:$0xf]
    %v84 = vld [vmem:[#allocation6 + $0x8] sm:$0xf]
    %v85 = vld [vmem:[#allocation6 + $0xc] sm:$0xf]
    %v86 = vld [vmem:[#allocation7] sm:$0x1]
    %v87 = vlaneseq
    %v88 = vshrl.u32 %v87, 7
    %v89 = vsub.s32 0, %v88
    %v90 = vrot.slane %v86, %v89
    %v95 = vunpack.c.l.b16 %v82
    %v96 = vunpack.c.l.b16 %v83
    %v97 = vunpack.c.l.b16 %v84
    %v98 = vunpack.c.l.b16 %v85
    %v99 = vpack.c.b16 %v96, %v95
    %v100 = vpack.c.b16 %v98, %v97
    %vm103 = vcmask 261120
    %v105 = vsel %vm103, %v81, 0
    %107 = vmatprep.subr.bf16.mxu0 0
    %108 = vmatpush1.bf16.msra.mxu0 %v99
    %109 = vmatprep.subr.bf16.mxu0 0
    %110 = vmatpush1.bf16.msra.mxu0 %v100
    %111 = vmatprep.subr.bf16.mxu0 0
    %112 = vmatpush1.bf16.msra.mxu0 0
    %113 = vmatprep.subr.bf16.mxu0 0
    %114 = vmatpush1.bf16.msra.mxu0 0
    %115 = vmatprep.subr.bf16.mxu0 0
    %116 = vmatpush1.bf16.msra.mxu0 0
    %117 = vmatprep.subr.bf16.mxu0 0
    %118 = vmatpush1.bf16.msra.mxu0 0
    %119 = vmatprep.subr.bf16.mxu0 0
    %120 = vmatpush1.bf16.msra.mxu0 0
    %121 = vmatprep.subr.bf16.mxu0 0
    %122 = vmatpush1.bf16.msra.mxu0 0
    %123 = vmatprep.subr.bf16.mxu0 0
    %124 = vmatpush1.bf16.msra.mxu0 0
    %125 = vmatprep.subr.bf16.mxu0 0
    %126 = vmatpush1.bf16.msra.mxu0 0
    %127 = vmatprep.subr.bf16.mxu0 0
    %128 = vmatpush1.bf16.msra.mxu0 0
    %129 = vmatprep.subr.bf16.mxu0 0
    %130 = vmatpush1.bf16.msra.mxu0 0
    %131 = vmatprep.subr.bf16.mxu0 0
    %132 = vmatpush1.bf16.msra.mxu0 0
    %133 = vmatprep.subr.bf16.mxu0 0
    %134 = vmatpush1.bf16.msra.mxu0 0
    %135 = vmatprep.subr.bf16.mxu0 0
    %136 = vmatpush1.bf16.msra.mxu0 0
    %137 = vmatprep.subr.bf16.mxu0 0
    %138 = vmatpush1.bf16.msra.mxu0 0
    %139 = vmatprep.mubr.bf16.mxu0 0
    %140 = vmatmul.mubr.bf16.gmra.mrb[0].mxu0 %v105
    %v141 = vpop.f32.mrb[0].mxu0
    %v142 = vadd.f32 %v90, %v141
    %v143 = vpop.f32.mrb[0].mxu0
    %v144 = vpop.f32.mrb[0].mxu0
    %v145 = vpop.f32.mrb[0].mxu0
    %146 = vdwg.mxu0
    %v147 = vmax.f32 %v142, 0.0
    %v148 = vpack.c.bf16 %v147, %v147
    %s149 = scalar_lea.vmem [#allocation6], 64
    %v150 = vld [vmem:[%s149] sm:$0xf]
    %v151 = vld [vmem:[%s149 + $0x4] sm:$0xf]
    %v152 = vld [vmem:[%s149 + $0x8] sm:$0xf]
    %v153 = vld [vmem:[%s149 + $0xc] sm:$0xf]
    %v154 = vld [vmem:[%s149 + $0x10] sm:$0xf]
    %v155 = vld [vmem:[%s149 + $0x14] sm:$0xf]
    %v156 = vld [vmem:[%s149 + $0x18] sm:$0xf]
    %v157 = vld [vmem:[%s149 + $0x1c] sm:$0xf]
    %v158 = vld [vmem:[%s149 + $0x20] sm:$0xf]
    %v159 = vld [vmem:[%s149 + $0x24] sm:$0xf]
    %v160 = vld [vmem:[%s149 + $0x28] sm:$0xf]
    %v161 = vld [vmem:[%s149 + $0x2c] sm:$0xf]
    %v162 = vld [vmem:[%s149 + $0x30] sm:$0xf]
    %v163 = vld [vmem:[%s149 + $0x34] sm:$0xf]
    %v164 = vld [vmem:[%s149 + $0x38] sm:$0xf]
    %v165 = vld [vmem:[%s149 + $0x3c] sm:$0xf]
    %v182 = vunpack.c.l.b16 %v150
    %v183 = vunpack.c.l.b16 %v151
    %v184 = vunpack.c.l.b16 %v152
    %v185 = vunpack.c.l.b16 %v153
    %v186 = vunpack.c.l.b16 %v154
    %v187 = vunpack.c.l.b16 %v155
    %v188 = vunpack.c.l.b16 %v156
    %v189 = vunpack.c.l.b16 %v157
    %v190 = vunpack.c.l.b16 %v158
    %v191 = vunpack.c.l.b16 %v159
    %v192 = vunpack.c.l.b16 %v160
    %v193 = vunpack.c.l.b16 %v161
    %v194 = vunpack.c.l.b16 %v162
    %v195 = vunpack.c.l.b16 %v163
    %v196 = vunpack.c.l.b16 %v164
    %v197 = vunpack.c.l.b16 %v165
    %v198 = vpack.c.b16 %v183, %v182
    %v199 = vpack.c.b16 %v185, %v184
    %v200 = vpack.c.b16 %v187, %v186
    %v201 = vpack.c.b16 %v189, %v188
    %v202 = vpack.c.b16 %v191, %v190
    %v203 = vpack.c.b16 %v193, %v192
    %v204 = vpack.c.b16 %v195, %v194
    %v205 = vpack.c.b16 %v197, %v196
    %214 = vmatprep.subr.bf16.mxu0 0
    %215 = vmatpush1.bf16.msra.mxu0 %v198
    %216 = vmatprep.subr.bf16.mxu0 0
    %217 = vmatpush1.bf16.msra.mxu0 %v199
    %218 = vmatprep.subr.bf16.mxu0 0
    %219 = vmatpush1.bf16.msra.mxu0 %v200
    %220 = vmatprep.subr.bf16.mxu0 0
    %221 = vmatpush1.bf16.msra.mxu0 %v201
    %222 = vmatprep.subr.bf16.mxu0 0
    %223 = vmatpush1.bf16.msra.mxu0 %v202
    %224 = vmatprep.subr.bf16.mxu0 0
    %225 = vmatpush1.bf16.msra.mxu0 %v203
    %226 = vmatprep.subr.bf16.mxu0 0
    %227 = vmatpush1.bf16.msra.mxu0 %v204
    %228 = vmatprep.subr.bf16.mxu0 0
    %229 = vmatpush1.bf16.msra.mxu0 %v205
    %230 = vmatprep.subr.bf16.mxu0 0
    %231 = vmatpush1.bf16.msra.mxu0 0
    %232 = vmatprep.subr.bf16.mxu0 0
    %233 = vmatpush1.bf16.msra.mxu0 0
    %234 = vmatprep.subr.bf16.mxu0 0
    %235 = vmatpush1.bf16.msra.mxu0 0
    %236 = vmatprep.subr.bf16.mxu0 0
    %237 = vmatpush1.bf16.msra.mxu0 0
    %238 = vmatprep.subr.bf16.mxu0 0
    %239 = vmatpush1.bf16.msra.mxu0 0
    %240 = vmatprep.subr.bf16.mxu0 0
    %241 = vmatpush1.bf16.msra.mxu0 0
    %242 = vmatprep.subr.bf16.mxu0 0
    %243 = vmatpush1.bf16.msra.mxu0 0
    %244 = vmatprep.subr.bf16.mxu0 0
    %245 = vmatpush1.bf16.msra.mxu0 0
    %246 = vmatprep.mubr.bf16.mxu0 0
    %247 = vmatmul.mubr.bf16.gmra.mrb[0].mxu0 %v148
    %v248 = vpop.f32.mrb[0].mxu0
    %v249 = vadd.f32 0.0, %v248
    %v250 = vpop.f32.mrb[0].mxu0
    %v251 = vpop.f32.mrb[0].mxu0
    %v252 = vpop.f32.mrb[0].mxu0
    %253 = vdwg.mxu0
    %v254 = vld [vmem:[#allocation7 + $0x1] sm:$0x1]
    %v255 = vld [vmem:[#allocation7 + $0x2] sm:$0x1]
    %v256 = vrot.slane %v249, 4
    %v257 = vadd.f32 %v249, %v256
    %v258 = vrot.slane %v257, 2
    %v259 = vadd.f32 %v257, %v258
    %v260 = vrot.slane %v259, 1
    %v261 = vadd.f32 %v259, %v260
    %v262 = vrcp.pop 8.0
    %v263 = vmul.f32 %v261, %v262
    %v264 = vsub.f32 %v249, %v263
    %v265 = vmul.f32 %v264, %v264
    %v266 = vrot.slane %v265, 4
    %v267 = vadd.f32 %v265, %v266
    %v268 = vrot.slane %v267, 2
    %v269 = vadd.f32 %v267, %v268
    %v270 = vrot.slane %v269, 1
    %v271 = vadd.f32 %v269, %v270
    %v272 = vmul.f32 %v271, %v262
    %v273 = vadd.f32 %v272, 1e-05
    %v274 = vrsqrt.pop %v273
    %v275 = vmul.f32 %v264, %v274
    %v276 = vlaneseq
    %v277 = vshrl.u32 %v276, 7
    %v278 = vsub.s32 0, %v277
    %v279 = vrot.slane %v254, %v278
    %v280 = vmul.f32 %v275, %v279
    %v281 = vlaneseq
    %v282 = vshrl.u32 %v281, 7
    %v283 = vsub.s32 0, %v282
    %v284 = vrot.slane %v255, %v283
    %v285 = vadd.f32 %v280, %v284
    %v286 = vmax.f32 %v285, 0.0
    %v287 = vpack.c.bf16 %v286, %v286
    %s288 = scalar_lea.vmem [#allocation6], 128
    %v289 = vld [vmem:[%s288] sm:$0xf]
    %v290 = vld [vmem:[%s288 + $0x4] sm:$0xf]
    %v291 = vld [vmem:[%s288 + $0x8] sm:$0xf]
    %v292 = vld [vmem:[%s288 + $0xc] sm:$0xf]
    %v293 = vld [vmem:[%s288 + $0x10] sm:$0xf]
    %v294 = vld [vmem:[%s288 + $0x14] sm:$0xf]
    %v295 = vld [vmem:[%s288 + $0x18] sm:$0xf]
    %v296 = vld [vmem:[%s288 + $0x1c] sm:$0xf]
    %v297 = vld [vmem:[%s288 + $0x20] sm:$0xf]
    %v298 = vld [vmem:[%s288 + $0x24] sm:$0xf]
    %v299 = vld [vmem:[%s288 + $0x28] sm:$0xf]
    %v300 = vld [vmem:[%s288 + $0x2c] sm:$0xf]
    %v301 = vld [vmem:[%s288 + $0x30] sm:$0xf]
    %v302 = vld [vmem:[%s288 + $0x34] sm:$0xf]
    %v303 = vld [vmem:[%s288 + $0x38] sm:$0xf]
    %v304 = vld [vmem:[%s288 + $0x3c] sm:$0xf]
    %v305 = vld [vmem:[#allocation7 + $0x3] sm:$0x1]
    %v306 = vlaneseq
    %v307 = vshrl.u32 %v306, 7
    %v308 = vsub.s32 0, %v307
    %v309 = vrot.slane %v305, %v308
    %v326 = vunpack.c.l.b16 %v289
    %v327 = vunpack.c.l.b16 %v290
    %v328 = vunpack.c.l.b16 %v291
    %v329 = vunpack.c.l.b16 %v292
    %v330 = vunpack.c.l.b16 %v293
    %v331 = vunpack.c.l.b16 %v294
    %v332 = vunpack.c.l.b16 %v295
    %v333 = vunpack.c.l.b16 %v296
    %v334 = vunpack.c.l.b16 %v297
    %v335 = vunpack.c.l.b16 %v298
    %v336 = vunpack.c.l.b16 %v299
    %v337 = vunpack.c.l.b16 %v300
    %v338 = vunpack.c.l.b16 %v301
    %v339 = vunpack.c.l.b16 %v302
    %v340 = vunpack.c.l.b16 %v303
    %v341 = vunpack.c.l.b16 %v304
    %v342 = vpack.c.b16 %v327, %v326
    %v343 = vpack.c.b16 %v329, %v328
    %v344 = vpack.c.b16 %v331, %v330
    %v345 = vpack.c.b16 %v333, %v332
    %v346 = vpack.c.b16 %v335, %v334
    %v347 = vpack.c.b16 %v337, %v336
    %v348 = vpack.c.b16 %v339, %v338
    %v349 = vpack.c.b16 %v341, %v340
    %358 = vmatprep.subr.bf16.mxu0 0
    %359 = vmatpush1.bf16.msra.mxu0 %v342
    %360 = vmatprep.subr.bf16.mxu0 0
    %361 = vmatpush1.bf16.msra.mxu0 %v343
    %362 = vmatprep.subr.bf16.mxu0 0
    %363 = vmatpush1.bf16.msra.mxu0 %v344
    %364 = vmatprep.subr.bf16.mxu0 0
    %365 = vmatpush1.bf16.msra.mxu0 %v345
    %366 = vmatprep.subr.bf16.mxu0 0
    %367 = vmatpush1.bf16.msra.mxu0 %v346
    %368 = vmatprep.subr.bf16.mxu0 0
    %369 = vmatpush1.bf16.msra.mxu0 %v347
    %370 = vmatprep.subr.bf16.mxu0 0
    %371 = vmatpush1.bf16.msra.mxu0 %v348
    %372 = vmatprep.subr.bf16.mxu0 0
    %373 = vmatpush1.bf16.msra.mxu0 %v349
    %374 = vmatprep.subr.bf16.mxu0 0
    %375 = vmatpush1.bf16.msra.mxu0 0
    %376 = vmatprep.subr.bf16.mxu0 0
    %377 = vmatpush1.bf16.msra.mxu0 0
    %378 = vmatprep.subr.bf16.mxu0 0
    %379 = vmatpush1.bf16.msra.mxu0 0
    %380 = vmatprep.subr.bf16.mxu0 0
    %381 = vmatpush1.bf16.msra.mxu0 0
    %382 = vmatprep.subr.bf16.mxu0 0
    %383 = vmatpush1.bf16.msra.mxu0 0
    %384 = vmatprep.subr.bf16.mxu0 0
    %385 = vmatpush1.bf16.msra.mxu0 0
    %386 = vmatprep.subr.bf16.mxu0 0
    %387 = vmatpush1.bf16.msra.mxu0 0
    %388 = vmatprep.subr.bf16.mxu0 0
    %389 = vmatpush1.bf16.msra.mxu0 0
    %390 = vmatprep.mubr.bf16.mxu0 0
    %391 = vmatmul.mubr.bf16.gmra.mrb[0].mxu0 %v287
    %v392 = vpop.f32.mrb[0].mxu0
    %v393 = vadd.f32 %v309, %v392
    %v394 = vpop.f32.mrb[0].mxu0
    %v395 = vpop.f32.mrb[0].mxu0
    %v396 = vpop.f32.mrb[0].mxu0
    %397 = vdwg.mxu0
    %v398 = vld [vmem:[#allocation4] sm:$0xff]
    %v399 = vld [vmem:[%s3] sm:$0xff]
    %401 = vrot.lane.b32.xlu0 %v399, 8
    %v402 = vpop.permute.xlu0 %401
    %vm404 = vcmask 64512
    %v405 = vsel %vm404, %v398, %v402
    %v406 = vmul.f32 %v393, 0.5
    %v407 = vmul.f32 %v406, 1.442695
    %v408 = vpow.pop %v407
    %410 = vrot.lane.b32.xlu0 %v405, 16
    %v411 = vpop.permute.xlu0 %410
    %v413 = vmul.f32 %v408, %v411
    %415 = vrot.lane.b32.xlu0 %v413, 112
    %v416 = vpop.permute.xlu0 %415
    %v418 = vadd.f32 %v393, %v416
    %v419 = vpack.c.bf16 %v418, %v418
    %s420 = scalar_lea.vmem [#allocation6], 192
    %v421 = vld [vmem:[%s420] sm:$0xf]
    %v422 = vld [vmem:[%s420 + $0x4] sm:$0xf]
    %v423 = vld [vmem:[#allocation7 + $0x4] sm:$0x1]
    %v424 = vlaneseq
    %v425 = vshrl.u32 %v424, 7
    %v426 = vsub.s32 0, %v425
    %v427 = vrot.slane %v423, %v426
    %v430 = vunpack.c.l.b16 %v421
    %v431 = vunpack.c.l.b16 %v422
    %v432 = vpack.c.b16 %v431, %v430
    %v435 = vsel %vm79, %v419, 0
    %437 = vmatprep.subr.bf16.mxu0 0
    %438 = vmatpush1.bf16.msra.mxu0 %v432
    %439 = vmatprep.subr.bf16.mxu0 0
    %440 = vmatpush1.bf16.msra.mxu0 0
    %441 = vmatprep.subr.bf16.mxu0 0
    %442 = vmatpush1.bf16.msra.mxu0 0
    %443 = vmatprep.subr.bf16.mxu0 0
    %444 = vmatpush1.bf16.msra.mxu0 0
    %445 = vmatprep.subr.bf16.mxu0 0
    %446 = vmatpush1.bf16.msra.mxu0 0
    %447 = vmatprep.subr.bf16.mxu0 0
    %448 = vmatpush1.bf16.msra.mxu0 0
    %449 = vmatprep.subr.bf16.mxu0 0
    %450 = vmatpush1.bf16.msra.mxu0 0
    %451 = vmatprep.subr.bf16.mxu0 0
    %452 = vmatpush1.bf16.msra.mxu0 0
    %453 = vmatprep.subr.bf16.mxu0 0
    %454 = vmatpush1.bf16.msra.mxu0 0
    %455 = vmatprep.subr.bf16.mxu0 0
    %456 = vmatpush1.bf16.msra.mxu0 0
    %457 = vmatprep.subr.bf16.mxu0 0
    %458 = vmatpush1.bf16.msra.mxu0 0
    %459 = vmatprep.subr.bf16.mxu0 0
    %460 = vmatpush1.bf16.msra.mxu0 0
    %461 = vmatprep.subr.bf16.mxu0 0
    %462 = vmatpush1.bf16.msra.mxu0 0
    %463 = vmatprep.subr.bf16.mxu0 0
    %464 = vmatpush1.bf16.msra.mxu0 0
    %465 = vmatprep.subr.bf16.mxu0 0
    %466 = vmatpush1.bf16.msra.mxu0 0
    %467 = vmatprep.subr.bf16.mxu0 0
    %468 = vmatpush1.bf16.msra.mxu0 0
    %469 = vmatprep.mubr.bf16.mxu0 0
    %470 = vmatmul.mubr.bf16.gmra.mrb[0].mxu0 %v435
    %v471 = vpop.f32.mrb[0].mxu0
    %v472 = vadd.f32 %v427, %v471
    %v473 = vpop.f32.mrb[0].mxu0
    %v474 = vpop.f32.mrb[0].mxu0
    %v475 = vpop.f32.mrb[0].mxu0
    %476 = vdwg.mxu0
    %v477 = vmax.f32 %v472, 0.0
    %v478 = vpack.c.bf16 %v477, %v477
    %s479 = scalar_lea.vmem [#allocation6], 256
    %v480 = vld [vmem:[%s479] sm:$0xf]
    %v481 = vld [vmem:[%s479 + $0x4] sm:$0xf]
    %v482 = vld [vmem:[%s479 + $0x8] sm:$0xf]
    %v483 = vld [vmem:[%s479 + $0xc] sm:$0xf]
    %v484 = vld [vmem:[%s479 + $0x10] sm:$0xf]
    %v485 = vld [vmem:[%s479 + $0x14] sm:$0xf]
    %v486 = vld [vmem:[%s479 + $0x18] sm:$0xf]
    %v487 = vld [vmem:[%s479 + $0x1c] sm:$0xf]
    %v488 = vld [vmem:[%s479 + $0x20] sm:$0xf]
    %v489 = vld [vmem:[%s479 + $0x24] sm:$0xf]
    %v490 = vld [vmem:[%s479 + $0x28] sm:$0xf]
    %v491 = vld [vmem:[%s479 + $0x2c] sm:$0xf]
    %v492 = vld [vmem:[%s479 + $0x30] sm:$0xf]
    %v493 = vld [vmem:[%s479 + $0x34] sm:$0xf]
    %v494 = vld [vmem:[%s479 + $0x38] sm:$0xf]
    %v495 = vld [vmem:[%s479 + $0x3c] sm:$0xf]
    %v512 = vunpack.c.l.b16 %v480
    %v513 = vunpack.c.l.b16 %v481
    %v514 = vunpack.c.l.b16 %v482
    %v515 = vunpack.c.l.b16 %v483
    %v516 = vunpack.c.l.b16 %v484
    %v517 = vunpack.c.l.b16 %v485
    %v518 = vunpack.c.l.b16 %v486
    %v519 = vunpack.c.l.b16 %v487
    %v520 = vunpack.c.l.b16 %v488
    %v521 = vunpack.c.l.b16 %v489
    %v522 = vunpack.c.l.b16 %v490
    %v523 = vunpack.c.l.b16 %v491
    %v524 = vunpack.c.l.b16 %v492
    %v525 = vunpack.c.l.b16 %v493
    %v526 = vunpack.c.l.b16 %v494
    %v527 = vunpack.c.l.b16 %v495
    %v528 = vpack.c.b16 %v513, %v512
    %v529 = vpack.c.b16 %v515, %v514
    %v530 = vpack.c.b16 %v517, %v516
    %v531 = vpack.c.b16 %v519, %v518
    %v532 = vpack.c.b16 %v521, %v520
    %v533 = vpack.c.b16 %v523, %v522
    %v534 = vpack.c.b16 %v525, %v524
    %v535 = vpack.c.b16 %v527, %v526
    %544 = vmatprep.subr.bf16.mxu0 0
    %545 = vmatpush1.bf16.msra.mxu0 %v528
    %546 = vmatprep.subr.bf16.mxu0 0
    %547 = vmatpush1.bf16.msra.mxu0 %v529
    %548 = vmatprep.subr.bf16.mxu0 0
    %549 = vmatpush1.bf16.msra.mxu0 %v530
    %550 = vmatprep.subr.bf16.mxu0 0
    %551 = vmatpush1.bf16.msra.mxu0 %v531
    %552 = vmatprep.subr.bf16.mxu0 0
    %553 = vmatpush1.bf16.msra.mxu0 %v532
    %554 = vmatprep.subr.bf16.mxu0 0
    %555 = vmatpush1.bf16.msra.mxu0 %v533
    %556 = vmatprep.subr.bf16.mxu0 0
    %557 = vmatpush1.bf16.msra.mxu0 %v534
    %558 = vmatprep.subr.bf16.mxu0 0
    %559 = vmatpush1.bf16.msra.mxu0 %v535
    %560 = vmatprep.subr.bf16.mxu0 0
    %561 = vmatpush1.bf16.msra.mxu0 0
    %562 = vmatprep.subr.bf16.mxu0 0
    %563 = vmatpush1.bf16.msra.mxu0 0
    %564 = vmatprep.subr.bf16.mxu0 0
    %565 = vmatpush1.bf16.msra.mxu0 0
    %566 = vmatprep.subr.bf16.mxu0 0
    %567 = vmatpush1.bf16.msra.mxu0 0
    %568 = vmatprep.subr.bf16.mxu0 0
    %569 = vmatpush1.bf16.msra.mxu0 0
    %570 = vmatprep.subr.bf16.mxu0 0
    %571 = vmatpush1.bf16.msra.mxu0 0
    %572 = vmatprep.subr.bf16.mxu0 0
    %573 = vmatpush1.bf16.msra.mxu0 0
    %574 = vmatprep.subr.bf16.mxu0 0
    %575 = vmatpush1.bf16.msra.mxu0 0
    %576 = vmatprep.mubr.bf16.mxu0 0
    %577 = vmatmul.mubr.bf16.gmra.mrb[0].mxu0 %v478
    %v578 = vpop.f32.mrb[0].mxu0
    %v579 = vadd.f32 0.0, %v578
    %v580 = vpop.f32.mrb[0].mxu0
    %v581 = vpop.f32.mrb[0].mxu0
    %v582 = vpop.f32.mrb[0].mxu0
    %583 = vdwg.mxu0
    %v584 = vld [vmem:[#allocation7 + $0x5] sm:$0x1]
    %v585 = vld [vmem:[#allocation7 + $0x6] sm:$0x1]
    %v586 = vrot.slane %v579, 4
    %v587 = vadd.f32 %v579, %v586
    %v588 = vrot.slane %v587, 2
    %v589 = vadd.f32 %v587, %v588
    %v590 = vrot.slane %v589, 1
    %v591 = vadd.f32 %v589, %v590
    %v592 = vmul.f32 %v591, %v262
    %v593 = vsub.f32 %v579, %v592
    %v594 = vmul.f32 %v593, %v593
    %v595 = vrot.slane %v594, 4
    %v596 = vadd.f32 %v594, %v595
    %v597 = vrot.slane %v596, 2
    %v598 = vadd.f32 %v596, %v597
    %v599 = vrot.slane %v598, 1
    %v600 = vadd.f32 %v598, %v599
    %v601 = vmul.f32 %v600, %v262
    %v602 = vadd.f32 %v601, 1e-05
    %v603 = vrsqrt.pop %v602
    %v604 = vmul.f32 %v593, %v603
    %v605 = vlaneseq
    %v606 = vshrl.u32 %v605, 7
    %v607 = vsub.s32 0, %v606
    %v608 = vrot.slane %v584, %v607
    %v609 = vmul.f32 %v604, %v608
    %v610 = vlaneseq
    %v611 = vshrl.u32 %v610, 7
    %v612 = vsub.s32 0, %v611
    %v613 = vrot.slane %v585, %v612
    %v614 = vadd.f32 %v609, %v613
    %v615 = vmax.f32 %v614, 0.0
    %v616 = vpack.c.bf16 %v615, %v615
    %s617 = scalar_lea.vmem [#allocation6], 320
    %v618 = vld [vmem:[%s617] sm:$0xf]
    %v619 = vld [vmem:[%s617 + $0x4] sm:$0xf]
    %v620 = vld [vmem:[%s617 + $0x8] sm:$0xf]
    %v621 = vld [vmem:[%s617 + $0xc] sm:$0xf]
    %v622 = vld [vmem:[%s617 + $0x10] sm:$0xf]
    %v623 = vld [vmem:[%s617 + $0x14] sm:$0xf]
    %v624 = vld [vmem:[%s617 + $0x18] sm:$0xf]
    %v625 = vld [vmem:[%s617 + $0x1c] sm:$0xf]
    %v626 = vld [vmem:[%s617 + $0x20] sm:$0xf]
    %v627 = vld [vmem:[%s617 + $0x24] sm:$0xf]
    %v628 = vld [vmem:[%s617 + $0x28] sm:$0xf]
    %v629 = vld [vmem:[%s617 + $0x2c] sm:$0xf]
    %v630 = vld [vmem:[%s617 + $0x30] sm:$0xf]
    %v631 = vld [vmem:[%s617 + $0x34] sm:$0xf]
    %v632 = vld [vmem:[%s617 + $0x38] sm:$0xf]
    %v633 = vld [vmem:[%s617 + $0x3c] sm:$0xf]
    %v634 = vld [vmem:[#allocation7 + $0x7] sm:$0x1]
    %v635 = vlaneseq
    %v636 = vshrl.u32 %v635, 7
    %v637 = vsub.s32 0, %v636
    %v638 = vrot.slane %v634, %v637
    %v655 = vunpack.c.l.b16 %v618
    %v656 = vunpack.c.l.b16 %v619
    %v657 = vunpack.c.l.b16 %v620
    %v658 = vunpack.c.l.b16 %v621
    %v659 = vunpack.c.l.b16 %v622
    %v660 = vunpack.c.l.b16 %v623
    %v661 = vunpack.c.l.b16 %v624
    %v662 = vunpack.c.l.b16 %v625
    %v663 = vunpack.c.l.b16 %v626
    %v664 = vunpack.c.l.b16 %v627
    %v665 = vunpack.c.l.b16 %v628
    %v666 = vunpack.c.l.b16 %v629
    %v667 = vunpack.c.l.b16 %v630
    %v668 = vunpack.c.l.b16 %v631
    %v669 = vunpack.c.l.b16 %v632
    %v670 = vunpack.c.l.b16 %v633
    %v671 = vpack.c.b16 %v656, %v655
    %v672 = vpack.c.b16 %v658, %v657
    %v673 = vpack.c.b16 %v660, %v659
    %v674 = vpack.c.b16 %v662, %v661
    %v675 = vpack.c.b16 %v664, %v663
    %v676 = vpack.c.b16 %v666, %v665
    %v677 = vpack.c.b16 %v668, %v667
    %v678 = vpack.c.b16 %v670, %v669
    %687 = vmatprep.subr.bf16.mxu0 0
    %688 = vmatpush1.bf16.msra.mxu0 %v671
    %689 = vmatprep.subr.bf16.mxu0 0
    %690 = vmatpush1.bf16.msra.mxu0 %v672
    %691 = vmatprep.subr.bf16.mxu0 0
    %692 = vmatpush1.bf16.msra.mxu0 %v673
    %693 = vmatprep.subr.bf16.mxu0 0
    %694 = vmatpush1.bf16.msra.mxu0 %v674
    %695 = vmatprep.subr.bf16.mxu0 0
    %696 = vmatpush1.bf16.msra.mxu0 %v675
    %697 = vmatprep.subr.bf16.mxu0 0
    %698 = vmatpush1.bf16.msra.mxu0 %v676
    %699 = vmatprep.subr.bf16.mxu0 0
    %700 = vmatpush1.bf16.msra.mxu0 %v677
    %701 = vmatprep.subr.bf16.mxu0 0
    %702 = vmatpush1.bf16.msra.mxu0 %v678
    %703 = vmatprep.subr.bf16.mxu0 0
    %704 = vmatpush1.bf16.msra.mxu0 0
    %705 = vmatprep.subr.bf16.mxu0 0
    %706 = vmatpush1.bf16.msra.mxu0 0
    %707 = vmatprep.subr.bf16.mxu0 0
    %708 = vmatpush1.bf16.msra.mxu0 0
    %709 = vmatprep.subr.bf16.mxu0 0
    %710 = vmatpush1.bf16.msra.mxu0 0
    %711 = vmatprep.subr.bf16.mxu0 0
    %712 = vmatpush1.bf16.msra.mxu0 0
    %713 = vmatprep.subr.bf16.mxu0 0
    %714 = vmatpush1.bf16.msra.mxu0 0
    %715 = vmatprep.subr.bf16.mxu0 0
    %716 = vmatpush1.bf16.msra.mxu0 0
    %717 = vmatprep.subr.bf16.mxu0 0
    %718 = vmatpush1.bf16.msra.mxu0 0
    %719 = vmatprep.mubr.bf16.mxu0 0
    %720 = vmatmul.mubr.bf16.gmra.mrb[0].mxu0 %v616
    %v721 = vpop.f32.mrb[0].mxu0
    %v722 = vadd.f32 %v638, %v721
    %v723 = vpop.f32.mrb[0].mxu0
    %v724 = vpop.f32.mrb[0].mxu0
    %v725 = vpop.f32.mrb[0].mxu0
    %726 = vdwg.mxu0
    %v727 = vlaneseq
    %v728 = vand.u32 %v727, 127
    %vm729 = vcmp.lt.s32.totalorder %v728, 0
    %v730 = vsub.s32 0, %v728
    %v731 = vsel %vm729, %v730, %v728
    %v732 = vshrl.u32 %v731, 3
    %v733 = vand.u32 %v731, 7
    %v734 = vsub.s32 0, %v733
    %v735 = vsel %vm729, %v734, %v733
    %vm736 = vcmp.ne.s32.totalorder %v735, 0
    %vm737 = vcmp.lt.s32.totalorder %v735, 0
    %vm738 = vmand %vm737, %vm736
    %v739 = vadd.s32 %v735, 8
    %v740 = vsel %vm738, %v739, %v735
    %vm741 = vcmp.lt.s32.totalorder %v740, 4
    %v742 = vsel %vm741, %v418, %v722
    %744 = vrot.lane.b32.xlu0 %v742, 16
    %v745 = vpop.permute.xlu0 %744
    %v747 = vsel %vm79, %v418, %v745
    %748 = vst.msk [vmem:[%s6] sm:$0xff] %vm103, %v747
    // Predicated region
    $region42: #{cyclegan_gen_forward.1} parent=1 // pred_check
      _
    $region43: #{cyclegan_gen_forward.1} parent=1 // pred_check_branch
      %750 = sbr.rel (0) target = $region45
    $region44: #{cyclegan_gen_forward.1} parent=1 // pred_region
      _
    $region45: #{cyclegan_gen_forward.1} parent=1 // pred_fallthru
      _
    // Predicated region
    $region46: #{cyclegan_gen_forward.1} parent=1 // pred_check
      _
    $region47: #{cyclegan_gen_forward.1} parent=1 // pred_check_branch
      %752 = sbr.rel (0) target = $region49
    $region48: #{cyclegan_gen_forward.1} parent=1 // pred_region
      _
    $region49: #{cyclegan_gen_forward.1} parent=1 // pred_fallthru
      _
    %753 = vsyncpa [#allocation3], 1
    %754 = vsyncpa [#allocation5], 1
    %755 = vsyncpa [#allocation8], 1

</llo_original>
